<compile_context>
chip_gen: v7x
topology: tpu7x:2x2x1
jax: 0.10.0
libtpu: 0.0.40
codegen_flags: <defaults>
</compile_context>

<pallas_src>
import functools

import jax
import jax.numpy as jnp
from jax.experimental import pallas as pl
from jax.experimental.pallas import tpu as pltpu

LANE = 128  # pad node / feature / class dims to full lane width -> unmasked vector ops


# ----------------------------------------------------------------------------
# Fused Pallas kernel: whole forward pass in one body
# ----------------------------------------------------------------------------
def _fused_gnn_kernel(x_ref, a_ref, w_ref, b_ref, o_ref, *, num_layers: int):
    """Single-invocation fused GNN forward.

    x_ref : [NP, 128]      node features, bf16, glove already folded into W0
    a_ref : [NP, NP]       normalized adjacency  D^-1/2 (A+I) D^-1/2, bf16
    w_ref : [L, 128, 128]  per-layer weights, bf16 (zero-padded lanes)
    b_ref : [L, NP, 128]   per-layer biases, f32, row-replicated; last layer's
                           padded lanes hold -1e30 (bakes the softmax mask)
    o_ref : [NP, 128]      log-softmax output (real rows/classes sliced outside)
    """
    f32, bf16 = jnp.float32, jnp.bfloat16

    a_hat = a_ref[...]          # bf16 MXU operand
    h = x_ref[...]              # bf16 MXU operand

    # GCN layers, statically unrolled: h = A_hat @ (h @ W_i) + b_i  (+ReLU).
    # Intermediates stay in vregs/VMEM — no HBM round trips between layers.
    for i in range(num_layers):
        t = jnp.dot(h, w_ref[i], preferred_element_type=f32)
        h = jnp.dot(a_hat, t.astype(bf16), preferred_element_type=f32) + b_ref[i]
        if i < num_layers - 1:
            h = jnp.maximum(h, 0.0).astype(bf16)
            # F.dropout(training=False) -> identity in eval mode.
            # TODO(synk): training-mode dropout (pltpu.prng_* masking) not implemented.

    # Fused row-wise log_softmax over all 128 lanes; the padded lanes already
    # carry -1e30 from the last bias, so they fall out of max/sum naturally
    # (no iota / compare / select needed here).
    m = jnp.max(h, axis=-1, keepdims=True)
    shifted = h - m
    denom = jnp.sum(jnp.exp(shifted), axis=-1, keepdims=True)
    o_ref[...] = (shifted - jnp.log(denom)).astype(o_ref.dtype)


# ----------------------------------------------------------------------------
# One-time packing (hoisted out of the per-call path)
# ----------------------------------------------------------------------------
def _pad2d(a, rows, cols, dtype):
    out = jnp.zeros((rows, cols), dtype)
    return out.at[: a.shape[0], : a.shape[1]].set(a.astype(dtype))


def prepare_packed_inputs(x, a_hat, glove_matrix, params, num_classes):
    """Fold glove into W0, pad everything to lane/sublane-dense bf16 slabs,
    replicate biases across rows, bake the softmax mask into the last bias."""
    del num_classes  # mask derives from each bias' own length
    n = x.shape[0]
    np_ = ((n + LANE - 1) // LANE) * LANE
    num_layers = len(params)

    # x @ G @ W0 == x @ (G @ W0): fold the glove projection into layer 0.
    w0_folded = jnp.dot(glove_matrix.astype(jnp.float32),
                        params[0][0].astype(jnp.float32),
                        precision=jax.lax.Precision.HIGHEST)
    ws = [w0_folded] + [w for w, _ in params[1:]]

    x_p = _pad2d(x, np_, LANE, jnp.bfloat16)                       # [NP, 128]
    a_p = _pad2d(a_hat, np_, np_, jnp.bfloat16)                    # [NP, NP]
    w_p = jnp.stack([_pad2d(w, LANE, LANE, jnp.bfloat16) for w in ws])  # [L,128,128]

    b_rows = []
    for i, (_, b) in enumerate(params):
        # Last layer: padded class lanes get -1e30 so the in-kernel log_softmax
        # needs no explicit mask.  Intermediate layers: padded lanes stay 0.
        fill = -1e30 if i == num_layers - 1 else 0.0
        row = jnp.full((LANE,), fill, jnp.float32).at[: b.shape[0]].set(
            b.astype(jnp.float32))
        b_rows.append(jnp.broadcast_to(row, (np_, LANE)))
    b_p = jnp.stack(b_rows)                                        # [L, NP, 128] f32

    return x_p, a_p, w_p, b_p, n


# ----------------------------------------------------------------------------
# Jitted forward: single pallas_call + slice
# ----------------------------------------------------------------------------
@functools.partial(jax.jit, static_argnames=("n", "num_classes"))
def fused_forward(x_p, a_p, w_p, b_p, *, n, num_classes):
    np_, lane = x_p.shape
    num_layers = w_p.shape[0]

    flops = num_layers * (2 * np_ * lane * lane + 2 * np_ * np_ * lane)
    bytes_accessed = (x_p.size * 2 + a_p.size * 2 + w_p.size * 2 +
                      b_p.size * 4 + np_ * lane * 4)

    out_padded = pl.pallas_call(
        functools.partial(_fused_gnn_kernel, num_layers=num_layers),
        out_shape=jax.ShapeDtypeStruct((np_, lane), jnp.float32),
        in_specs=[pl.BlockSpec(memory_space=pltpu.MemorySpace.VMEM)
                  for _ in range(4)],
        out_specs=pl.BlockSpec(memory_space=pltpu.MemorySpace.VMEM),
        cost_estimate=pl.CostEstimate(
            flops=flops,
            transcendentals=np_ * lane + np_,   # exp + log in the epilogue
            bytes_accessed=bytes_accessed),
    )(x_p, a_p, w_p, b_p)

    # Slice the logical rows / class columns back out of the lane-dense output.
    return out_padded[:n, :num_classes]


# ----------------------------------------------------------------------------
# Model glue (plain JAX): adjacency normalization, params, references
# ----------------------------------------------------------------------------
def build_norm_adj(edge_index, num_nodes):
    """A_hat = D^-1/2 (A + I) D^-1/2, dense, symmetric (undirected edges)."""
    A = jnp.zeros((num_nodes, num_nodes), jnp.float32)
    A = A.at[edge_index[0], edge_index[1]].set(1.0)
    A = A.at[edge_index[1], edge_index[0]].set(1.0)
    A = A + jnp.eye(num_nodes, dtype=jnp.float32)
    deg = jnp.sum(A, axis=1)
    d_inv_sqrt = 1.0 / jnp.sqrt(deg)
    return A * d_inv_sqrt[:, None] * d_inv_sqrt[None, :]


def init_params(key, num_features, num_classes, num_layers):
    hidden_dims = [32] * (num_layers - 1)
    all_channels = [num_features] + hidden_dims + [num_classes]
    params = []
    for in_c, out_c in zip(all_channels[:-1], all_channels[1:]):
        key, wk, bk = jax.random.split(key, 3)
        scale = jnp.sqrt(6.0 / (in_c + out_c))  # glorot-uniform style
        w = jax.random.uniform(wk, (in_c, out_c), jnp.float32, -scale, scale)
        b = 0.1 * jax.random.normal(bk, (out_c,), jnp.float32)
        params.append((w, b))
    return params


def reference_forward_f32(x, a_hat, glove_matrix, params):
    """Pure-JAX full-precision reference."""
    hp = jax.lax.Precision.HIGHEST
    h = jnp.dot(x, glove_matrix, precision=hp)
    n_layers = len(params)
    for i, (w, b) in enumerate(params):
        t = jnp.dot(h, w, precision=hp)
        h = jnp.dot(a_hat, t, precision=hp) + b
        if i < n_layers - 1:
            h = jnp.maximum(h, 0.0)
    return jax.nn.log_softmax(h, axis=-1)


def reference_forward_bf16(x, a_hat, glove_matrix, params):
    """Pure-JAX reference mimicking the kernel's arithmetic (bf16 MXU operands,
    f32 accumulation, glove folded into W0)."""
    f32, bf16 = jnp.float32, jnp.bfloat16
    w0 = jnp.dot(glove_matrix.astype(f32), params[0][0].astype(f32),
                 precision=jax.lax.Precision.HIGHEST)
    ws = [w0] + [w for w, _ in params[1:]]
    bs = [b for _, b in params]
    n_layers = len(params)
    h = x.astype(bf16)
    a = a_hat.astype(bf16)
    for i in range(n_layers):
        t = jnp.dot(h, ws[i].astype(bf16), preferred_element_type=f32)
        hf = jnp.dot(a, t.astype(bf16), preferred_element_type=f32) + bs[i]
        h = jnp.maximum(hf, 0.0).astype(bf16) if i < n_layers - 1 else hf
    return jax.nn.log_softmax(h, axis=-1)


# ----------------------------------------------------------------------------
# Main
# ----------------------------------------------------------------------------
if __name__ == "__main__":
    num_nodes = 32
    num_features = 16
    num_classes = 8
    num_layers = 3  # -> channels [16, 32, 32, 8]

    key = jax.random.PRNGKey(0)
    key, xk, ek, pk = jax.random.split(key, 4)

    # Deterministic node features.
    x = jax.random.normal(xk, (num_nodes, num_features), jnp.float32)

    # Deterministic edge_index: a ring plus a few pseudo-random extra edges.
    src_ring = jnp.arange(num_nodes, dtype=jnp.int32)
    dst_ring = (src_ring + 1) % num_nodes
    extra_src = jax.random.randint(ek, (16,), 0, num_nodes, dtype=jnp.int32)
    extra_dst = (extra_src + 5) % num_nodes
    edge_index = jnp.stack(
        [jnp.concatenate([src_ring, extra_src]),
         jnp.concatenate([dst_ring, extra_dst])], axis=0)

    a_hat = build_norm_adj(edge_index, num_nodes)
    glove_matrix = jnp.eye(num_features, dtype=jnp.float32)
    params = init_params(pk, num_features, num_classes, num_layers)

    # One-time packing (hoisted out of the per-call path).
    x_p, a_p, w_p, b_p, n = prepare_packed_inputs(
        x, a_hat, glove_matrix, params, num_classes)

    out = fused_forward(x_p, a_p, w_p, b_p, n=n, num_classes=num_classes)
    out = jax.block_until_ready(out)

    assert out.shape == (num_nodes, num_classes)

    # Sanity 1: each row of log_softmax output exponentiates and sums to ~1.
    row_sums = jnp.exp(out).sum(axis=1)
    assert bool(jnp.all(jnp.abs(row_sums - 1.0) < 1e-4))

    # Sanity 2: matches a reference using the same arithmetic (bf16 operands,
    # f32 accumulation) — tight tolerance.
    ref_bf16 = reference_forward_bf16(x, a_hat, glove_matrix, params)
    err_bf16 = jnp.max(jnp.abs(out - ref_bf16))
    assert bool(err_bf16 < 5e-3), f"max abs err vs bf16 reference = {err_bf16}"

    # Sanity 3: close to the full-precision reference (loose bound; bf16 MXU
    # operands introduce ~1e-2 level differences on the logits).
    ref_f32 = reference_forward_f32(x, a_hat, glove_matrix, params)
    err_f32 = jnp.max(jnp.abs(out - ref_f32))
    assert bool(err_f32 < 1e-1), f"max abs err vs f32 reference = {err_f32}"

    print("KERNEL_OK")
</pallas_src>

<mosaic_0001>
module attributes {stable_mosaic.version = 11 : i64} {
  func.func @_fused_gnn_kernel(%arg0: memref<128x128xbf16, #tpu.memory_space<vmem>>, %arg1: memref<128x128xbf16, #tpu.memory_space<vmem>>, %arg2: memref<3x128x128xbf16, #tpu.memory_space<vmem>>, %arg3: memref<3x128x128xf32, #tpu.memory_space<vmem>>, %arg4: memref<128x128xf32, #tpu.memory_space<vmem>>) attributes {dimension_semantics = [], scalar_prefetch = 0 : i64, scratch_operands = 0 : i64, tpu.core_type = #tpu.core_type<tc>} {
    %c0 = arith.constant 0 : index
    %c0_0 = arith.constant 0 : index
    %0 = vector.load %arg1[%c0, %c0_0] : memref<128x128xbf16, #tpu.memory_space<vmem>>, vector<128x128xbf16>
    %c0_1 = arith.constant 0 : index
    %c0_2 = arith.constant 0 : index
    %1 = vector.load %arg0[%c0_1, %c0_2] : memref<128x128xbf16, #tpu.memory_space<vmem>>, vector<128x128xbf16>
    %c0_3 = arith.constant 0 : index
    %c0_4 = arith.constant 0 : index
    %c0_5 = arith.constant 0 : index
    %2 = vector.load %arg2[%c0_3, %c0_4, %c0_5] : memref<3x128x128xbf16, #tpu.memory_space<vmem>>, vector<1x128x128xbf16>
    %3 = vector.shape_cast %2 : vector<1x128x128xbf16> to vector<128x128xbf16>
    %cst = arith.constant dense<0.000000e+00> : vector<128x128xf32>
    %4 = tpu.matmul %1, %3, %cst {dimension_numbers = #tpu.dot_dimension_numbers<[1], [0], [0], [1], [0, 0, 1, 1], [], []>} : vector<128x128xbf16>, vector<128x128xbf16>, vector<128x128xf32> -> vector<128x128xf32>
    %5 = arith.truncf %4 : vector<128x128xf32> to vector<128x128xbf16>
    %cst_6 = arith.constant dense<0.000000e+00> : vector<128x128xf32>
    %6 = tpu.matmul %0, %5, %cst_6 {dimension_numbers = #tpu.dot_dimension_numbers<[1], [0], [0], [1], [0, 0, 1, 1], [], []>} : vector<128x128xbf16>, vector<128x128xbf16>, vector<128x128xf32> -> vector<128x128xf32>
    %c0_7 = arith.constant 0 : index
    %c0_8 = arith.constant 0 : index
    %c0_9 = arith.constant 0 : index
    %7 = vector.load %arg3[%c0_7, %c0_8, %c0_9] : memref<3x128x128xf32, #tpu.memory_space<vmem>>, vector<1x128x128xf32>
    %8 = vector.shape_cast %7 : vector<1x128x128xf32> to vector<128x128xf32>
    %9 = arith.addf %6, %8 : vector<128x128xf32>
    %cst_10 = arith.constant 0.000000e+00 : f32
    %10 = vector.broadcast %cst_10 : f32 to vector<128x128xf32>
    %11 = arith.maximumf %9, %10 : vector<128x128xf32>
    %12 = arith.truncf %11 : vector<128x128xf32> to vector<128x128xbf16>
    %c1 = arith.constant 1 : index
    %c0_11 = arith.constant 0 : index
    %c0_12 = arith.constant 0 : index
    %13 = vector.load %arg2[%c1, %c0_11, %c0_12] : memref<3x128x128xbf16, #tpu.memory_space<vmem>>, vector<1x128x128xbf16>
    %14 = vector.shape_cast %13 : vector<1x128x128xbf16> to vector<128x128xbf16>
    %cst_13 = arith.constant dense<0.000000e+00> : vector<128x128xf32>
    %15 = tpu.matmul %12, %14, %cst_13 {dimension_numbers = #tpu.dot_dimension_numbers<[1], [0], [0], [1], [0, 0, 1, 1], [], []>} : vector<128x128xbf16>, vector<128x128xbf16>, vector<128x128xf32> -> vector<128x128xf32>
    %16 = arith.truncf %15 : vector<128x128xf32> to vector<128x128xbf16>
    %cst_14 = arith.constant dense<0.000000e+00> : vector<128x128xf32>
    %17 = tpu.matmul %0, %16, %cst_14 {dimension_numbers = #tpu.dot_dimension_numbers<[1], [0], [0], [1], [0, 0, 1, 1], [], []>} : vector<128x128xbf16>, vector<128x128xbf16>, vector<128x128xf32> -> vector<128x128xf32>
    %c1_15 = arith.constant 1 : index
    %c0_16 = arith.constant 0 : index
    %c0_17 = arith.constant 0 : index
    %18 = vector.load %arg3[%c1_15, %c0_16, %c0_17] : memref<3x128x128xf32, #tpu.memory_space<vmem>>, vector<1x128x128xf32>
    %19 = vector.shape_cast %18 : vector<1x128x128xf32> to vector<128x128xf32>
    %20 = arith.addf %17, %19 : vector<128x128xf32>
    %cst_18 = arith.constant 0.000000e+00 : f32
    %21 = vector.broadcast %cst_18 : f32 to vector<128x128xf32>
    %22 = arith.maximumf %20, %21 : vector<128x128xf32>
    %23 = arith.truncf %22 : vector<128x128xf32> to vector<128x128xbf16>
    %c2 = arith.constant 2 : index
    %c0_19 = arith.constant 0 : index
    %c0_20 = arith.constant 0 : index
    %24 = vector.load %arg2[%c2, %c0_19, %c0_20] : memref<3x128x128xbf16, #tpu.memory_space<vmem>>, vector<1x128x128xbf16>
    %25 = vector.shape_cast %24 : vector<1x128x128xbf16> to vector<128x128xbf16>
    %cst_21 = arith.constant dense<0.000000e+00> : vector<128x128xf32>
    %26 = tpu.matmul %23, %25, %cst_21 {dimension_numbers = #tpu.dot_dimension_numbers<[1], [0], [0], [1], [0, 0, 1, 1], [], []>} : vector<128x128xbf16>, vector<128x128xbf16>, vector<128x128xf32> -> vector<128x128xf32>
    %27 = arith.truncf %26 : vector<128x128xf32> to vector<128x128xbf16>
    %cst_22 = arith.constant dense<0.000000e+00> : vector<128x128xf32>
    %28 = tpu.matmul %0, %27, %cst_22 {dimension_numbers = #tpu.dot_dimension_numbers<[1], [0], [0], [1], [0, 0, 1, 1], [], []>} : vector<128x128xbf16>, vector<128x128xbf16>, vector<128x128xf32> -> vector<128x128xf32>
    %c2_23 = arith.constant 2 : index
    %c0_24 = arith.constant 0 : index
    %c0_25 = arith.constant 0 : index
    %29 = vector.load %arg3[%c2_23, %c0_24, %c0_25] : memref<3x128x128xf32, #tpu.memory_space<vmem>>, vector<1x128x128xf32>
    %30 = vector.shape_cast %29 : vector<1x128x128xf32> to vector<128x128xf32>
    %31 = arith.addf %28, %30 : vector<128x128xf32>
    %cst_26 = arith.constant dense<0xFF800000> : vector<128xf32>
    %32 = vector.multi_reduction <maximumf>, %31, %cst_26 [1] : vector<128x128xf32> to vector<128xf32>
    %33 = vector.shape_cast %32 : vector<128xf32> to vector<128x1xf32>
    %34 = vector.broadcast %33 : vector<128x1xf32> to vector<128x128xf32>
    %35 = arith.subf %31, %34 : vector<128x128xf32>
    %36 = math.exp %35 : vector<128x128xf32>
    %cst_27 = arith.constant dense<0.000000e+00> : vector<128xf32>
    %37 = vector.multi_reduction <add>, %36, %cst_27 [1] : vector<128x128xf32> to vector<128xf32>
    %38 = vector.shape_cast %37 : vector<128xf32> to vector<128x1xf32>
    %39 = math.log %38 : vector<128x1xf32>
    %40 = vector.broadcast %39 : vector<128x1xf32> to vector<128x128xf32>
    %41 = arith.subf %35, %40 : vector<128x128xf32>
    %c0_28 = arith.constant 0 : index
    %c0_29 = arith.constant 0 : index
    %42 = vector.load %arg4[%c0_28, %c0_29] : memref<128x128xf32, #tpu.memory_space<vmem>>, vector<128x128xf32>
    tpu.vector_store %arg4[%c0_28, %c0_29], %41 {strides = array<i32>} : memref<128x128xf32, #tpu.memory_space<vmem>>, vector<128x128xf32>,
    return
  }
}

</mosaic_0001>

<llo_original>
// kernel: fused_forward.1
$region0: #{fused_forward.1}
  #allocation0 [shape = 'u32[]', space=smem, size = 0x4, offset = 0x4, fixed_abs, tag = 'smem constant byte address 0x4 - core index']
  #allocation1 [shape = 'u32[144,128]{1,0:T(1,128)}', space=vmem, size = 0x12000, scoped, tag = 'internal scratch']
  %s0 = inlined_call_operand.hbm [shape: bf16[128,128], index: 0, kind: input, shape index: {}]
  %s1 = inlined_call_operand.hbm [shape: bf16[128,128], index: 1, kind: input, shape index: {}]
  %s2 = inlined_call_operand.hbm [shape: bf16[3,128,128], index: 2, kind: input, shape index: {}]
  %s3 = inlined_call_operand.hbm [shape: f32[3,128,128], index: 3, kind: input, shape index: {}]
  %s4 = inlined_call_operand.vmem [shape: f32[128,128], index: 4, kind: output, shape index: {}]
  %s5 = sld [smem:[#allocation0]]
  $region42: #{fused_forward.1} parent=0
    _
  %s7 = ssub.s32 1, %s5
  %s8 = scalar_select 0, %s7, %s5
  $region1: #{fused_forward.1} parent=0
    #allocation2 [shape = 'u8[32768]{0}', space=vmem, size = 0x8000, scoped, tag = 'input window, operand 0, single buffered']
    #allocation3 [shape = 's32[1]{0}', space=sflag, size = 0x4, scoped, tag = 'scoped memory for fused_forward.1']
    #allocation4 [shape = 'u8[32768]{0}', space=vmem, size = 0x8000, scoped, tag = 'input window, operand 1, single buffered']
    #allocation5 [shape = 's32[1]{0}', space=sflag, size = 0x4, scoped, tag = 'scoped memory for fused_forward.1']
    #allocation6 [shape = 'u8[98304]{0}', space=vmem, size = 0x18000, scoped, tag = 'input window, operand 2, single buffered']
    #allocation7 [shape = 'u8[196608]{0}', space=vmem, size = 0x30000, scoped, tag = 'input window, operand 3, single buffered']
    #allocation8 [shape = 's32[1]{0}', space=sflag, size = 0x4, scoped, tag = 'scoped memory for fused_forward.1']
    %9 = vsyncpa [#allocation3], 0
    %10 = vsyncpa [#allocation5], 0
    %11 = vsyncpa [#allocation8], 0
    // Predicated region
    $region2: #{fused_forward.1} parent=1 // pred_check
      _
    $region3: #{fused_forward.1} parent=1 // pred_check_branch
      %13 = sbr.rel (0) target = $region5
    $region4: #{fused_forward.1} parent=1 // pred_region
      %s15 = ssub.s32 1024, 1024
      %16 = vsyncadd [#allocation3], %s15
      %s17 = sshll.u32 [#allocation2], 4
      %s18 = int_to_ptr.vmem [resolvable:$true] %s17
      %23 = dma.hbm_to_vmem [thread:$0]  %s0, 1024, %s18, [#allocation3], 64, 64, 4
    $region5: #{fused_forward.1} parent=1 // pred_fallthru
      _
    // Predicated region
    $region6: #{fused_forward.1} parent=1 // pred_check
      _
    $region7: #{fused_forward.1} parent=1 // pred_check_branch
      %25 = sbr.rel (0) target = $region9
    $region8: #{fused_forward.1} parent=1 // pred_region
      %s27 = ssub.s32 1024, 1024
      %28 = vsyncadd [#allocation5], %s27
      %s29 = sshll.u32 [#allocation4], 4
      %s30 = int_to_ptr.vmem [resolvable:$true] %s29
      %35 = dma.hbm_to_vmem [thread:$0]  %s1, 1024, %s30, [#allocation5], 64, 64, 4
    $region9: #{fused_forward.1} parent=1 // pred_fallthru
      _
    // Predicated region
    $region10: #{fused_forward.1} parent=1 // pred_check
      _
    $region11: #{fused_forward.1} parent=1 // pred_check_branch
      %37 = sbr.rel (0) target = $region13
    $region12: #{fused_forward.1} parent=1 // pred_region
      %s39 = ssub.s32 3072, 3072
      %40 = vsyncadd [#allocation5], %s39
      %s41 = sshll.u32 [#allocation6], 4
      %s42 = int_to_ptr.vmem [resolvable:$true] %s41
      %47 = dma.hbm_to_vmem [thread:$0]  %s2, 3072, %s42, [#allocation5], 64, 64, 4
    $region13: #{fused_forward.1} parent=1 // pred_fallthru
      _
    // Predicated region
    $region14: #{fused_forward.1} parent=1 // pred_check
      _
    $region15: #{fused_forward.1} parent=1 // pred_check_branch
      %49 = sbr.rel (0) target = $region17
    $region16: #{fused_forward.1} parent=1 // pred_region
      %s51 = ssub.s32 6144, 6144
      %52 = vsyncadd [#allocation8], %s51
      %s53 = sshll.u32 [#allocation7], 4
      %s54 = int_to_ptr.vmem [resolvable:$true] %s53
      %59 = dma.hbm_to_vmem [thread:$0]  %s3, 6144, %s54, [#allocation8], 128, 128, 8
    $region17: #{fused_forward.1} parent=1 // pred_fallthru
      _
    // Predicated region
    $region18: #{fused_forward.1} parent=1 // pred_check
      _
    $region19: #{fused_forward.1} parent=1 // pred_check_branch
      %61 = sbr.rel (0) target = $region21
    $region20: #{fused_forward.1} parent=1 // pred_region
      %62 = dma.done [#allocation3], 1024
    $region21: #{fused_forward.1} parent=1 // pred_fallthru
      _
    // Predicated region
    $region22: #{fused_forward.1} parent=1 // pred_check
      _
    $region23: #{fused_forward.1} parent=1 // pred_check_branch
      %64 = sbr.rel (0) target = $region25
    $region24: #{fused_forward.1} parent=1 // pred_region
      %65 = dma.done [#allocation5], 1024
    $region25: #{fused_forward.1} parent=1 // pred_fallthru
      _
    // Predicated region
    $region26: #{fused_forward.1} parent=1 // pred_check
      _
    $region27: #{fused_forward.1} parent=1 // pred_check_branch
      %67 = sbr.rel (0) target = $region29
    $region28: #{fused_forward.1} parent=1 // pred_region
      %68 = dma.done [#allocation5], 3072
    $region29: #{fused_forward.1} parent=1 // pred_fallthru
      _
    // Predicated region
    $region30: #{fused_forward.1} parent=1 // pred_check
      _
    $region31: #{fused_forward.1} parent=1 // pred_check_branch
      %70 = sbr.rel (0) target = $region33
    $region32: #{fused_forward.1} parent=1 // pred_region
      %71 = dma.done [#allocation8], 6144
    $region33: #{fused_forward.1} parent=1 // pred_fallthru
      _
    %v73 = vld [vmem:[#allocation4] sm:$0xf]
    %v74 = vld [vmem:[#allocation4 + $0x4] sm:$0xf]
    %v75 = vld [vmem:[#allocation4 + $0x8] sm:$0xf]
    %v76 = vld [vmem:[#allocation4 + $0xc] sm:$0xf]
    %v77 = vld [vmem:[#allocation4 + $0x10] sm:$0xf]
    %v78 = vld [vmem:[#allocation4 + $0x14] sm:$0xf]
    %v79 = vld [vmem:[#allocation4 + $0x18] sm:$0xf]
    %v80 = vld [vmem:[#allocation4 + $0x1c] sm:$0xf]
    %v81 = vld [vmem:[#allocation4 + $0x20] sm:$0xf]
    %v82 = vld [vmem:[#allocation4 + $0x24] sm:$0xf]
    %v83 = vld [vmem:[#allocation4 + $0x28] sm:$0xf]
    %v84 = vld [vmem:[#allocation4 + $0x2c] sm:$0xf]
    %v85 = vld [vmem:[#allocation4 + $0x30] sm:$0xf]
    %v86 = vld [vmem:[#allocation4 + $0x34] sm:$0xf]
    %v87 = vld [vmem:[#allocation4 + $0x38] sm:$0xf]
    %v88 = vld [vmem:[#allocation4 + $0x3c] sm:$0xf]
    %v89 = vld [vmem:[#allocation2] sm:$0xf]
    %v90 = vld [vmem:[#allocation2 + $0x4] sm:$0xf]
    %v91 = vld [vmem:[#allocation2 + $0x8] sm:$0xf]
    %v92 = vld [vmem:[#allocation2 + $0xc] sm:$0xf]
    %v93 = vld [vmem:[#allocation2 + $0x10] sm:$0xf]
    %v94 = vld [vmem:[#allocation2 + $0x14] sm:$0xf]
    %v95 = vld [vmem:[#allocation2 + $0x18] sm:$0xf]
    %v96 = vld [vmem:[#allocation2 + $0x1c] sm:$0xf]
    %v97 = vld [vmem:[#allocation2 + $0x20] sm:$0xf]
    %v98 = vld [vmem:[#allocation2 + $0x24] sm:$0xf]
    %v99 = vld [vmem:[#allocation2 + $0x28] sm:$0xf]
    %v100 = vld [vmem:[#allocation2 + $0x2c] sm:$0xf]
    %v101 = vld [vmem:[#allocation2 + $0x30] sm:$0xf]
    %v102 = vld [vmem:[#allocation2 + $0x34] sm:$0xf]
    %v103 = vld [vmem:[#allocation2 + $0x38] sm:$0xf]
    %v104 = vld [vmem:[#allocation2 + $0x3c] sm:$0xf]
    %v105 = vld [vmem:[#allocation6] sm:$0xf]
    %v106 = vld [vmem:[#allocation6 + $0x4] sm:$0xf]
    %v107 = vld [vmem:[#allocation6 + $0x8] sm:$0xf]
    %v108 = vld [vmem:[#allocation6 + $0xc] sm:$0xf]
    %v109 = vld [vmem:[#allocation6 + $0x10] sm:$0xf]
    %v110 = vld [vmem:[#allocation6 + $0x14] sm:$0xf]
    %v111 = vld [vmem:[#allocation6 + $0x18] sm:$0xf]
    %v112 = vld [vmem:[#allocation6 + $0x1c] sm:$0xf]
    %v113 = vld [vmem:[#allocation6 + $0x20] sm:$0xf]
    %v114 = vld [vmem:[#allocation6 + $0x24] sm:$0xf]
    %v115 = vld [vmem:[#allocation6 + $0x28] sm:$0xf]
    %v116 = vld [vmem:[#allocation6 + $0x2c] sm:$0xf]
    %v117 = vld [vmem:[#allocation6 + $0x30] sm:$0xf]
    %v118 = vld [vmem:[#allocation6 + $0x34] sm:$0xf]
    %v119 = vld [vmem:[#allocation6 + $0x38] sm:$0xf]
    %v120 = vld [vmem:[#allocation6 + $0x3c] sm:$0xf]
    %v137 = vunpack.c.l.b16 %v89
    %v138 = vunpack.c.l.b16 %v90
    %v139 = vunpack.c.l.b16 %v91
    %v140 = vunpack.c.l.b16 %v92
    %v141 = vunpack.c.l.b16 %v93
    %v142 = vunpack.c.l.b16 %v94
    %v143 = vunpack.c.l.b16 %v95
    %v144 = vunpack.c.l.b16 %v96
    %v145 = vunpack.c.l.b16 %v97
    %v146 = vunpack.c.l.b16 %v98
    %v147 = vunpack.c.l.b16 %v99
    %v148 = vunpack.c.l.b16 %v100
    %v149 = vunpack.c.l.b16 %v101
    %v150 = vunpack.c.l.b16 %v102
    %v151 = vunpack.c.l.b16 %v103
    %v152 = vunpack.c.l.b16 %v104
    %v153 = vpack.c.b16 %v138, %v137
    %v154 = vpack.c.b16 %v140, %v139
    %v155 = vpack.c.b16 %v142, %v141
    %v156 = vpack.c.b16 %v144, %v143
    %v157 = vpack.c.b16 %v146, %v145
    %v158 = vpack.c.b16 %v148, %v147
    %v159 = vpack.c.b16 %v150, %v149
    %v160 = vpack.c.b16 %v152, %v151
    %v185 = vunpack.c.l.b16 %v105
    %v186 = vunpack.c.l.b16 %v106
    %v187 = vunpack.c.l.b16 %v107
    %v188 = vunpack.c.l.b16 %v108
    %v189 = vunpack.c.l.b16 %v109
    %v190 = vunpack.c.l.b16 %v110
    %v191 = vunpack.c.l.b16 %v111
    %v192 = vunpack.c.l.b16 %v112
    %v193 = vunpack.c.l.b16 %v113
    %v194 = vunpack.c.l.b16 %v114
    %v195 = vunpack.c.l.b16 %v115
    %v196 = vunpack.c.l.b16 %v116
    %v197 = vunpack.c.l.b16 %v117
    %v198 = vunpack.c.l.b16 %v118
    %v199 = vunpack.c.l.b16 %v119
    %v200 = vunpack.c.l.b16 %v120
    %v201 = vpack.c.b16 %v186, %v185
    %v202 = vpack.c.b16 %v188, %v187
    %v203 = vpack.c.b16 %v190, %v189
    %v204 = vpack.c.b16 %v192, %v191
    %v205 = vpack.c.b16 %v194, %v193
    %v206 = vpack.c.b16 %v196, %v195
    %v207 = vpack.c.b16 %v198, %v197
    %v208 = vpack.c.b16 %v200, %v199
    %217 = vmatprep.subr.bf16.mxu0 0
    %218 = vmatpush1.bf16.msra.mxu0 %v201
    %219 = vmatprep.subr.bf16.mxu0 0
    %220 = vmatpush1.bf16.msra.mxu0 %v202
    %221 = vmatprep.subr.bf16.mxu0 0
    %222 = vmatpush1.bf16.msra.mxu0 %v203
    %223 = vmatprep.subr.bf16.mxu0 0
    %224 = vmatpush1.bf16.msra.mxu0 %v204
    %225 = vmatprep.subr.bf16.mxu0 0
    %226 = vmatpush1.bf16.msra.mxu0 %v205
    %227 = vmatprep.subr.bf16.mxu0 0
    %228 = vmatpush1.bf16.msra.mxu0 %v206
    %229 = vmatprep.subr.bf16.mxu0 0
    %230 = vmatpush1.bf16.msra.mxu0 %v207
    %231 = vmatprep.subr.bf16.mxu0 0
    %232 = vmatpush1.bf16.msra.mxu0 %v208
    %233 = vmatprep.subr.bf16.mxu0 0
    %234 = vmatpush1.bf16.msra.mxu0 0
    %235 = vmatprep.subr.bf16.mxu0 0
    %236 = vmatpush1.bf16.msra.mxu0 0
    %237 = vmatprep.subr.bf16.mxu0 0
    %238 = vmatpush1.bf16.msra.mxu0 0
    %239 = vmatprep.subr.bf16.mxu0 0
    %240 = vmatpush1.bf16.msra.mxu0 0
    %241 = vmatprep.subr.bf16.mxu0 0
    %242 = vmatpush1.bf16.msra.mxu0 0
    %243 = vmatprep.subr.bf16.mxu0 0
    %244 = vmatpush1.bf16.msra.mxu0 0
    %245 = vmatprep.subr.bf16.mxu0 0
    %246 = vmatpush1.bf16.msra.mxu0 0
    %247 = vmatprep.subr.bf16.mxu0 0
    %248 = vmatpush1.bf16.msra.mxu0 0
    %249 = vmatprep.mubr.bf16.mxu0 0
    %250 = vmatmul.mubr.bf16.gmra.mrb[0].mxu0 %v153
    %v251 = vpop.f32.mrb[0].mxu0
    %v252 = vadd.f32 0.0, %v251
    %v253 = vpop.f32.mrb[0].mxu0
    %v254 = vpop.f32.mrb[0].mxu0
    %v255 = vadd.f32 0.0, %v254
    %v256 = vpop.f32.mrb[0].mxu0
    %257 = vmatprep.mubr.bf16.mxu0 0
    %258 = vmatmul.mubr.bf16.gmra.mrb[0].mxu0 %v154
    %v259 = vpop.f32.mrb[0].mxu0
    %v260 = vadd.f32 0.0, %v259
    %v261 = vpop.f32.mrb[0].mxu0
    %v262 = vpop.f32.mrb[0].mxu0
    %v263 = vadd.f32 0.0, %v262
    %v264 = vpop.f32.mrb[0].mxu0
    %265 = vmatprep.mubr.bf16.mxu0 0
    %266 = vmatmul.mubr.bf16.gmra.mrb[0].mxu0 %v155
    %v267 = vpop.f32.mrb[0].mxu0
    %v268 = vadd.f32 0.0, %v267
    %v269 = vpop.f32.mrb[0].mxu0
    %v270 = vpop.f32.mrb[0].mxu0
    %v271 = vadd.f32 0.0, %v270
    %v272 = vpop.f32.mrb[0].mxu0
    %273 = vmatprep.mubr.bf16.mxu0 0
    %274 = vmatmul.mubr.bf16.gmra.mrb[0].mxu0 %v156
    %v275 = vpop.f32.mrb[0].mxu0
    %v276 = vadd.f32 0.0, %v275
    %v277 = vpop.f32.mrb[0].mxu0
    %v278 = vpop.f32.mrb[0].mxu0
    %v279 = vadd.f32 0.0, %v278
    %v280 = vpop.f32.mrb[0].mxu0
    %281 = vmatprep.mubr.bf16.mxu0 0
    %282 = vmatmul.mubr.bf16.gmra.mrb[0].mxu0 %v157
    %v283 = vpop.f32.mrb[0].mxu0
    %v284 = vadd.f32 0.0, %v283
    %v285 = vpop.f32.mrb[0].mxu0
    %v286 = vpop.f32.mrb[0].mxu0
    %v287 = vadd.f32 0.0, %v286
    %v288 = vpop.f32.mrb[0].mxu0
    %289 = vmatprep.mubr.bf16.mxu0 0
    %290 = vmatmul.mubr.bf16.gmra.mrb[0].mxu0 %v158
    %v291 = vpop.f32.mrb[0].mxu0
    %v292 = vadd.f32 0.0, %v291
    %v293 = vpop.f32.mrb[0].mxu0
    %v294 = vpop.f32.mrb[0].mxu0
    %v295 = vadd.f32 0.0, %v294
    %v296 = vpop.f32.mrb[0].mxu0
    %297 = vmatprep.mubr.bf16.mxu0 0
    %298 = vmatmul.mubr.bf16.gmra.mrb[0].mxu0 %v159
    %v299 = vpop.f32.mrb[0].mxu0
    %v300 = vadd.f32 0.0, %v299
    %v301 = vpop.f32.mrb[0].mxu0
    %v302 = vpop.f32.mrb[0].mxu0
    %v303 = vadd.f32 0.0, %v302
    %v304 = vpop.f32.mrb[0].mxu0
    %305 = vmatprep.mubr.bf16.mxu0 0
    %306 = vmatmul.mubr.bf16.gmra.mrb[0].mxu0 %v160
    %v307 = vpop.f32.mrb[0].mxu0
    %v308 = vadd.f32 0.0, %v307
    %v309 = vpop.f32.mrb[0].mxu0
    %v310 = vpop.f32.mrb[0].mxu0
    %v311 = vadd.f32 0.0, %v310
    %v312 = vpop.f32.mrb[0].mxu0
    %313 = vdwg.mxu0
    %v314 = vpack.c.bf16 %v255, %v252
    %v315 = vpack.c.bf16 %v263, %v260
    %v316 = vpack.c.bf16 %v271, %v268
    %v317 = vpack.c.bf16 %v279, %v276
    %v318 = vpack.c.bf16 %v287, %v284
    %v319 = vpack.c.bf16 %v295, %v292
    %v320 = vpack.c.bf16 %v303, %v300
    %v321 = vpack.c.bf16 %v311, %v308
    %v322 = vld [vmem:[#allocation7] sm:$0xff]
    %v323 = vld [vmem:[#allocation7 + $0x8] sm:$0xff]
    %v324 = vld [vmem:[#allocation7 + $0x10] sm:$0xff]
    %v325 = vld [vmem:[#allocation7 + $0x18] sm:$0xff]
    %v326 = vld [vmem:[#allocation7 + $0x20] sm:$0xff]
    %v327 = vld [vmem:[#allocation7 + $0x28] sm:$0xff]
    %v328 = vld [vmem:[#allocation7 + $0x30] sm:$0xff]
    %v329 = vld [vmem:[#allocation7 + $0x38] sm:$0xff]
    %v330 = vld [vmem:[#allocation7 + $0x40] sm:$0xff]
    %v331 = vld [vmem:[#allocation7 + $0x48] sm:$0xff]
    %v332 = vld [vmem:[#allocation7 + $0x50] sm:$0xff]
    %v333 = vld [vmem:[#allocation7 + $0x58] sm:$0xff]
    %v334 = vld [vmem:[#allocation7 + $0x60] sm:$0xff]
    %v335 = vld [vmem:[#allocation7 + $0x68] sm:$0xff]
    %v336 = vld [vmem:[#allocation7 + $0x70] sm:$0xff]
    %v337 = vld [vmem:[#allocation7 + $0x78] sm:$0xff]
    %v354 = vunpack.c.l.b16 %v73
    %v355 = vunpack.c.l.b16 %v74
    %v356 = vunpack.c.l.b16 %v75
    %v357 = vunpack.c.l.b16 %v76
    %v358 = vunpack.c.l.b16 %v77
    %v359 = vunpack.c.l.b16 %v78
    %v360 = vunpack.c.l.b16 %v79
    %v361 = vunpack.c.l.b16 %v80
    %v362 = vunpack.c.l.b16 %v81
    %v363 = vunpack.c.l.b16 %v82
    %v364 = vunpack.c.l.b16 %v83
    %v365 = vunpack.c.l.b16 %v84
    %v366 = vunpack.c.l.b16 %v85
    %v367 = vunpack.c.l.b16 %v86
    %v368 = vunpack.c.l.b16 %v87
    %v369 = vunpack.c.l.b16 %v88
    %v370 = vpack.c.b16 %v355, %v354
    %v371 = vpack.c.b16 %v357, %v356
    %v372 = vpack.c.b16 %v359, %v358
    %v373 = vpack.c.b16 %v361, %v360
    %v374 = vpack.c.b16 %v363, %v362
    %v375 = vpack.c.b16 %v365, %v364
    %v376 = vpack.c.b16 %v367, %v366
    %v377 = vpack.c.b16 %v369, %v368
    %386 = vmatprep.subr.bf16.mxu0 0
    %387 = vmatpush1.bf16.msra.mxu0 %v314
    %388 = vmatprep.subr.bf16.mxu0 0
    %389 = vmatpush1.bf16.msra.mxu0 %v315
    %390 = vmatprep.subr.bf16.mxu0 0
    %391 = vmatpush1.bf16.msra.mxu0 %v316
    %392 = vmatprep.subr.bf16.mxu0 0
    %393 = vmatpush1.bf16.msra.mxu0 %v317
    %394 = vmatprep.subr.bf16.mxu0 0
    %395 = vmatpush1.bf16.msra.mxu0 %v318
    %396 = vmatprep.subr.bf16.mxu0 0
    %397 = vmatpush1.bf16.msra.mxu0 %v319
    %398 = vmatprep.subr.bf16.mxu0 0
    %399 = vmatpush1.bf16.msra.mxu0 %v320
    %400 = vmatprep.subr.bf16.mxu0 0
    %401 = vmatpush1.bf16.msra.mxu0 %v321
    %402 = vmatprep.subr.bf16.mxu0 0
    %403 = vmatpush1.bf16.msra.mxu0 0
    %404 = vmatprep.subr.bf16.mxu0 0
    %405 = vmatpush1.bf16.msra.mxu0 0
    %406 = vmatprep.subr.bf16.mxu0 0
    %407 = vmatpush1.bf16.msra.mxu0 0
    %408 = vmatprep.subr.bf16.mxu0 0
    %409 = vmatpush1.bf16.msra.mxu0 0
    %410 = vmatprep.subr.bf16.mxu0 0
    %411 = vmatpush1.bf16.msra.mxu0 0
    %412 = vmatprep.subr.bf16.mxu0 0
    %413 = vmatpush1.bf16.msra.mxu0 0
    %414 = vmatprep.subr.bf16.mxu0 0
    %415 = vmatpush1.bf16.msra.mxu0 0
    %416 = vmatprep.subr.bf16.mxu0 0
    %417 = vmatpush1.bf16.msra.mxu0 0
    %418 = vmatprep.mubr.bf16.mxu0 0
    %419 = vmatmul.mubr.bf16.gmra.mrb[0].mxu0 %v370
    %v420 = vpop.f32.mrb[0].mxu0
    %v421 = vadd.f32 %v322, %v420
    %v422 = vpop.f32.mrb[0].mxu0
    %v423 = vpop.f32.mrb[0].mxu0
    %v424 = vadd.f32 %v323, %v423
    %v425 = vpop.f32.mrb[0].mxu0
    %426 = vmatprep.mubr.bf16.mxu0 0
    %427 = vmatmul.mubr.bf16.gmra.mrb[0].mxu0 %v371
    %v428 = vpop.f32.mrb[0].mxu0
    %v429 = vadd.f32 %v324, %v428
    %v430 = vpop.f32.mrb[0].mxu0
    %v431 = vpop.f32.mrb[0].mxu0
    %v432 = vadd.f32 %v325, %v431
    %v433 = vpop.f32.mrb[0].mxu0
    %434 = vmatprep.mubr.bf16.mxu0 0
    %435 = vmatmul.mubr.bf16.gmra.mrb[0].mxu0 %v372
    %v436 = vpop.f32.mrb[0].mxu0
    %v437 = vadd.f32 %v326, %v436
    %v438 = vpop.f32.mrb[0].mxu0
    %v439 = vpop.f32.mrb[0].mxu0
    %v440 = vadd.f32 %v327, %v439
    %v441 = vpop.f32.mrb[0].mxu0
    %442 = vmatprep.mubr.bf16.mxu0 0
    %443 = vmatmul.mubr.bf16.gmra.mrb[0].mxu0 %v373
    %v444 = vpop.f32.mrb[0].mxu0
    %v445 = vadd.f32 %v328, %v444
    %v446 = vpop.f32.mrb[0].mxu0
    %v447 = vpop.f32.mrb[0].mxu0
    %v448 = vadd.f32 %v329, %v447
    %v449 = vpop.f32.mrb[0].mxu0
    %450 = vmatprep.mubr.bf16.mxu0 0
    %451 = vmatmul.mubr.bf16.gmra.mrb[0].mxu0 %v374
    %v452 = vpop.f32.mrb[0].mxu0
    %v453 = vadd.f32 %v330, %v452
    %v454 = vpop.f32.mrb[0].mxu0
    %v455 = vpop.f32.mrb[0].mxu0
    %v456 = vadd.f32 %v331, %v455
    %v457 = vpop.f32.mrb[0].mxu0
    %458 = vmatprep.mubr.bf16.mxu0 0
    %459 = vmatmul.mubr.bf16.gmra.mrb[0].mxu0 %v375
    %v460 = vpop.f32.mrb[0].mxu0
    %v461 = vadd.f32 %v332, %v460
    %v462 = vpop.f32.mrb[0].mxu0
    %v463 = vpop.f32.mrb[0].mxu0
    %v464 = vadd.f32 %v333, %v463
    %v465 = vpop.f32.mrb[0].mxu0
    %466 = vmatprep.mubr.bf16.mxu0 0
    %467 = vmatmul.mubr.bf16.gmra.mrb[0].mxu0 %v376
    %v468 = vpop.f32.mrb[0].mxu0
    %v469 = vadd.f32 %v334, %v468
    %v470 = vpop.f32.mrb[0].mxu0
    %v471 = vpop.f32.mrb[0].mxu0
    %v472 = vadd.f32 %v335, %v471
    %v473 = vpop.f32.mrb[0].mxu0
    %474 = vmatprep.mubr.bf16.mxu0 0
    %475 = vmatmul.mubr.bf16.gmra.mrb[0].mxu0 %v377
    %v476 = vpop.f32.mrb[0].mxu0
    %v477 = vadd.f32 %v336, %v476
    %v478 = vpop.f32.mrb[0].mxu0
    %v479 = vpop.f32.mrb[0].mxu0
    %v480 = vadd.f32 %v337, %v479
    %v481 = vpop.f32.mrb[0].mxu0
    %482 = vdwg.mxu0
    %v483 = vmax.f32 %v421, 0.0
    %v484 = vmax.f32 %v424, 0.0
    %v485 = vmax.f32 %v429, 0.0
    %v486 = vmax.f32 %v432, 0.0
    %v487 = vmax.f32 %v437, 0.0
    %v488 = vmax.f32 %v440, 0.0
    %v489 = vmax.f32 %v445, 0.0
    %v490 = vmax.f32 %v448, 0.0
    %v491 = vmax.f32 %v453, 0.0
    %v492 = vmax.f32 %v456, 0.0
    %v493 = vmax.f32 %v461, 0.0
    %v494 = vmax.f32 %v464, 0.0
    %v495 = vmax.f32 %v469, 0.0
    %v496 = vmax.f32 %v472, 0.0
    %v497 = vmax.f32 %v477, 0.0
    %v498 = vmax.f32 %v480, 0.0
    %v499 = vpack.c.bf16 %v484, %v483
    %v500 = vpack.c.bf16 %v486, %v485
    %v501 = vpack.c.bf16 %v488, %v487
    %v502 = vpack.c.bf16 %v490, %v489
    %v503 = vpack.c.bf16 %v492, %v491
    %v504 = vpack.c.bf16 %v494, %v493
    %v505 = vpack.c.bf16 %v496, %v495
    %v506 = vpack.c.bf16 %v498, %v497
    %s507 = scalar_lea.vmem [#allocation6], 64
    %v508 = vld [vmem:[%s507] sm:$0xf]
    %v509 = vld [vmem:[%s507 + $0x4] sm:$0xf]
    %v510 = vld [vmem:[%s507 + $0x8] sm:$0xf]
    %v511 = vld [vmem:[%s507 + $0xc] sm:$0xf]
    %v512 = vld [vmem:[%s507 + $0x10] sm:$0xf]
    %v513 = vld [vmem:[%s507 + $0x14] sm:$0xf]
    %v514 = vld [vmem:[%s507 + $0x18] sm:$0xf]
    %v515 = vld [vmem:[%s507 + $0x1c] sm:$0xf]
    %v516 = vld [vmem:[%s507 + $0x20] sm:$0xf]
    %v517 = vld [vmem:[%s507 + $0x24] sm:$0xf]
    %v518 = vld [vmem:[%s507 + $0x28] sm:$0xf]
    %v519 = vld [vmem:[%s507 + $0x2c] sm:$0xf]
    %v520 = vld [vmem:[%s507 + $0x30] sm:$0xf]
    %v521 = vld [vmem:[%s507 + $0x34] sm:$0xf]
    %v522 = vld [vmem:[%s507 + $0x38] sm:$0xf]
    %v523 = vld [vmem:[%s507 + $0x3c] sm:$0xf]
    %v540 = vunpack.c.l.b16 %v508
    %v541 = vunpack.c.l.b16 %v509
    %v542 = vunpack.c.l.b16 %v510
    %v543 = vunpack.c.l.b16 %v511
    %v544 = vunpack.c.l.b16 %v512
    %v545 = vunpack.c.l.b16 %v513
    %v546 = vunpack.c.l.b16 %v514
    %v547 = vunpack.c.l.b16 %v515
    %v548 = vunpack.c.l.b16 %v516
    %v549 = vunpack.c.l.b16 %v517
    %v550 = vunpack.c.l.b16 %v518
    %v551 = vunpack.c.l.b16 %v519
    %v552 = vunpack.c.l.b16 %v520
    %v553 = vunpack.c.l.b16 %v521
    %v554 = vunpack.c.l.b16 %v522
    %v555 = vunpack.c.l.b16 %v523
    %v556 = vpack.c.b16 %v541, %v540
    %v557 = vpack.c.b16 %v543, %v542
    %v558 = vpack.c.b16 %v545, %v544
    %v559 = vpack.c.b16 %v547, %v546
    %v560 = vpack.c.b16 %v549, %v548
    %v561 = vpack.c.b16 %v551, %v550
    %v562 = vpack.c.b16 %v553, %v552
    %v563 = vpack.c.b16 %v555, %v554
    %572 = vmatprep.subr.bf16.mxu0 0
    %573 = vmatpush1.bf16.msra.mxu0 %v556
    %574 = vmatprep.subr.bf16.mxu0 0
    %575 = vmatpush1.bf16.msra.mxu0 %v557
    %576 = vmatprep.subr.bf16.mxu0 0
    %577 = vmatpush1.bf16.msra.mxu0 %v558
    %578 = vmatprep.subr.bf16.mxu0 0
    %579 = vmatpush1.bf16.msra.mxu0 %v559
    %580 = vmatprep.subr.bf16.mxu0 0
    %581 = vmatpush1.bf16.msra.mxu0 %v560
    %582 = vmatprep.subr.bf16.mxu0 0
    %583 = vmatpush1.bf16.msra.mxu0 %v561
    %584 = vmatprep.subr.bf16.mxu0 0
    %585 = vmatpush1.bf16.msra.mxu0 %v562
    %586 = vmatprep.subr.bf16.mxu0 0
    %587 = vmatpush1.bf16.msra.mxu0 %v563
    %588 = vmatprep.subr.bf16.mxu0 0
    %589 = vmatpush1.bf16.msra.mxu0 0
    %590 = vmatprep.subr.bf16.mxu0 0
    %591 = vmatpush1.bf16.msra.mxu0 0
    %592 = vmatprep.subr.bf16.mxu0 0
    %593 = vmatpush1.bf16.msra.mxu0 0
    %594 = vmatprep.subr.bf16.mxu0 0
    %595 = vmatpush1.bf16.msra.mxu0 0
    %596 = vmatprep.subr.bf16.mxu0 0
    %597 = vmatpush1.bf16.msra.mxu0 0
    %598 = vmatprep.subr.bf16.mxu0 0
    %599 = vmatpush1.bf16.msra.mxu0 0
    %600 = vmatprep.subr.bf16.mxu0 0
    %601 = vmatpush1.bf16.msra.mxu0 0
    %602 = vmatprep.subr.bf16.mxu0 0
    %603 = vmatpush1.bf16.msra.mxu0 0
    %604 = vmatprep.mubr.bf16.mxu0 0
    %605 = vmatmul.mubr.bf16.gmra.mrb[0].mxu0 %v499
    %v606 = vpop.f32.mrb[0].mxu0
    %v607 = vadd.f32 0.0, %v606
    %v608 = vpop.f32.mrb[0].mxu0
    %v609 = vpop.f32.mrb[0].mxu0
    %v610 = vadd.f32 0.0, %v609
    %v611 = vpop.f32.mrb[0].mxu0
    %612 = vmatprep.mubr.bf16.mxu0 0
    %613 = vmatmul.mubr.bf16.gmra.mrb[0].mxu0 %v500
    %v614 = vpop.f32.mrb[0].mxu0
    %v615 = vadd.f32 0.0, %v614
    %v616 = vpop.f32.mrb[0].mxu0
    %v617 = vpop.f32.mrb[0].mxu0
    %v618 = vadd.f32 0.0, %v617
    %v619 = vpop.f32.mrb[0].mxu0
    %620 = vmatprep.mubr.bf16.mxu0 0
    %621 = vmatmul.mubr.bf16.gmra.mrb[0].mxu0 %v501
    %v622 = vpop.f32.mrb[0].mxu0
    %v623 = vadd.f32 0.0, %v622
    %v624 = vpop.f32.mrb[0].mxu0
    %v625 = vpop.f32.mrb[0].mxu0
    %v626 = vadd.f32 0.0, %v625
    %v627 = vpop.f32.mrb[0].mxu0
    %628 = vmatprep.mubr.bf16.mxu0 0
    %629 = vmatmul.mubr.bf16.gmra.mrb[0].mxu0 %v502
    %v630 = vpop.f32.mrb[0].mxu0
    %v631 = vadd.f32 0.0, %v630
    %v632 = vpop.f32.mrb[0].mxu0
    %v633 = vpop.f32.mrb[0].mxu0
    %v634 = vadd.f32 0.0, %v633
    %v635 = vpop.f32.mrb[0].mxu0
    %636 = vmatprep.mubr.bf16.mxu0 0
    %637 = vmatmul.mubr.bf16.gmra.mrb[0].mxu0 %v503
    %v638 = vpop.f32.mrb[0].mxu0
    %v639 = vadd.f32 0.0, %v638
    %v640 = vpop.f32.mrb[0].mxu0
    %v641 = vpop.f32.mrb[0].mxu0
    %v642 = vadd.f32 0.0, %v641
    %v643 = vpop.f32.mrb[0].mxu0
    %644 = vmatprep.mubr.bf16.mxu0 0
    %645 = vmatmul.mubr.bf16.gmra.mrb[0].mxu0 %v504
    %v646 = vpop.f32.mrb[0].mxu0
    %v647 = vadd.f32 0.0, %v646
    %v648 = vpop.f32.mrb[0].mxu0
    %v649 = vpop.f32.mrb[0].mxu0
    %v650 = vadd.f32 0.0, %v649
    %v651 = vpop.f32.mrb[0].mxu0
    %652 = vmatprep.mubr.bf16.mxu0 0
    %653 = vmatmul.mubr.bf16.gmra.mrb[0].mxu0 %v505
    %v654 = vpop.f32.mrb[0].mxu0
    %v655 = vadd.f32 0.0, %v654
    %v656 = vpop.f32.mrb[0].mxu0
    %v657 = vpop.f32.mrb[0].mxu0
    %v658 = vadd.f32 0.0, %v657
    %v659 = vpop.f32.mrb[0].mxu0
    %660 = vmatprep.mubr.bf16.mxu0 0
    %661 = vmatmul.mubr.bf16.gmra.mrb[0].mxu0 %v506
    %v662 = vpop.f32.mrb[0].mxu0
    %v663 = vadd.f32 0.0, %v662
    %v664 = vpop.f32.mrb[0].mxu0
    %v665 = vpop.f32.mrb[0].mxu0
    %v666 = vadd.f32 0.0, %v665
    %v667 = vpop.f32.mrb[0].mxu0
    %668 = vdwg.mxu0
    %v669 = vpack.c.bf16 %v610, %v607
    %v670 = vpack.c.bf16 %v618, %v615
    %v671 = vpack.c.bf16 %v626, %v623
    %v672 = vpack.c.bf16 %v634, %v631
    %v673 = vpack.c.bf16 %v642, %v639
    %v674 = vpack.c.bf16 %v650, %v647
    %v675 = vpack.c.bf16 %v658, %v655
    %v676 = vpack.c.bf16 %v666, %v663
    %s677 = scalar_lea.vmem [#allocation7], 128
    %v678 = vld [vmem:[%s677] sm:$0xff]
    %v679 = vld [vmem:[%s677 + $0x8] sm:$0xff]
    %v680 = vld [vmem:[%s677 + $0x10] sm:$0xff]
    %v681 = vld [vmem:[%s677 + $0x18] sm:$0xff]
    %v682 = vld [vmem:[%s677 + $0x20] sm:$0xff]
    %v683 = vld [vmem:[%s677 + $0x28] sm:$0xff]
    %v684 = vld [vmem:[%s677 + $0x30] sm:$0xff]
    %v685 = vld [vmem:[%s677 + $0x38] sm:$0xff]
    %v686 = vld [vmem:[%s677 + $0x40] sm:$0xff]
    %v687 = vld [vmem:[%s677 + $0x48] sm:$0xff]
    %v688 = vld [vmem:[%s677 + $0x50] sm:$0xff]
    %v689 = vld [vmem:[%s677 + $0x58] sm:$0xff]
    %v690 = vld [vmem:[%s677 + $0x60] sm:$0xff]
    %v691 = vld [vmem:[%s677 + $0x68] sm:$0xff]
    %v692 = vld [vmem:[%s677 + $0x70] sm:$0xff]
    %v693 = vld [vmem:[%s677 + $0x78] sm:$0xff]
    %694 = vmatprep.subr.bf16.mxu0 0
    %695 = vmatpush1.bf16.msra.mxu0 %v669
    %696 = vmatprep.subr.bf16.mxu0 0
    %697 = vmatpush1.bf16.msra.mxu0 %v670
    %698 = vmatprep.subr.bf16.mxu0 0
    %699 = vmatpush1.bf16.msra.mxu0 %v671
    %700 = vmatprep.subr.bf16.mxu0 0
    %701 = vmatpush1.bf16.msra.mxu0 %v672
    %702 = vmatprep.subr.bf16.mxu0 0
    %703 = vmatpush1.bf16.msra.mxu0 %v673
    %704 = vmatprep.subr.bf16.mxu0 0
    %705 = vmatpush1.bf16.msra.mxu0 %v674
    %706 = vmatprep.subr.bf16.mxu0 0
    %707 = vmatpush1.bf16.msra.mxu0 %v675
    %708 = vmatprep.subr.bf16.mxu0 0
    %709 = vmatpush1.bf16.msra.mxu0 %v676
    %710 = vmatprep.subr.bf16.mxu0 0
    %711 = vmatpush1.bf16.msra.mxu0 0
    %712 = vmatprep.subr.bf16.mxu0 0
    %713 = vmatpush1.bf16.msra.mxu0 0
    %714 = vmatprep.subr.bf16.mxu0 0
    %715 = vmatpush1.bf16.msra.mxu0 0
    %716 = vmatprep.subr.bf16.mxu0 0
    %717 = vmatpush1.bf16.msra.mxu0 0
    %718 = vmatprep.subr.bf16.mxu0 0
    %719 = vmatpush1.bf16.msra.mxu0 0
    %720 = vmatprep.subr.bf16.mxu0 0
    %721 = vmatpush1.bf16.msra.mxu0 0
    %722 = vmatprep.subr.bf16.mxu0 0
    %723 = vmatpush1.bf16.msra.mxu0 0
    %724 = vmatprep.subr.bf16.mxu0 0
    %725 = vmatpush1.bf16.msra.mxu0 0
    %726 = vmatprep.mubr.bf16.mxu0 0
    %727 = vmatmul.mubr.bf16.gmra.mrb[0].mxu0 %v370
    %v728 = vpop.f32.mrb[0].mxu0
    %v729 = vadd.f32 %v678, %v728
    %v730 = vpop.f32.mrb[0].mxu0
    %v731 = vpop.f32.mrb[0].mxu0
    %v732 = vadd.f32 %v679, %v731
    %v733 = vpop.f32.mrb[0].mxu0
    %734 = vmatprep.mubr.bf16.mxu0 0
    %735 = vmatmul.mubr.bf16.gmra.mrb[0].mxu0 %v371
    %v736 = vpop.f32.mrb[0].mxu0
    %v737 = vadd.f32 %v680, %v736
    %v738 = vpop.f32.mrb[0].mxu0
    %v739 = vpop.f32.mrb[0].mxu0
    %v740 = vadd.f32 %v681, %v739
    %v741 = vpop.f32.mrb[0].mxu0
    %742 = vmatprep.mubr.bf16.mxu0 0
    %743 = vmatmul.mubr.bf16.gmra.mrb[0].mxu0 %v372
    %v744 = vpop.f32.mrb[0].mxu0
    %v745 = vadd.f32 %v682, %v744
    %v746 = vpop.f32.mrb[0].mxu0
    %v747 = vpop.f32.mrb[0].mxu0
    %v748 = vadd.f32 %v683, %v747
    %v749 = vpop.f32.mrb[0].mxu0
    %750 = vmatprep.mubr.bf16.mxu0 0
    %751 = vmatmul.mubr.bf16.gmra.mrb[0].mxu0 %v373
    %v752 = vpop.f32.mrb[0].mxu0
    %v753 = vadd.f32 %v684, %v752
    %v754 = vpop.f32.mrb[0].mxu0
    %v755 = vpop.f32.mrb[0].mxu0
    %v756 = vadd.f32 %v685, %v755
    %v757 = vpop.f32.mrb[0].mxu0
    %758 = vmatprep.mubr.bf16.mxu0 0
    %759 = vmatmul.mubr.bf16.gmra.mrb[0].mxu0 %v374
    %v760 = vpop.f32.mrb[0].mxu0
    %v761 = vadd.f32 %v686, %v760
    %v762 = vpop.f32.mrb[0].mxu0
    %v763 = vpop.f32.mrb[0].mxu0
    %v764 = vadd.f32 %v687, %v763
    %v765 = vpop.f32.mrb[0].mxu0
    %766 = vmatprep.mubr.bf16.mxu0 0
    %767 = vmatmul.mubr.bf16.gmra.mrb[0].mxu0 %v375
    %v768 = vpop.f32.mrb[0].mxu0
    %v769 = vadd.f32 %v688, %v768
    %v770 = vpop.f32.mrb[0].mxu0
    %v771 = vpop.f32.mrb[0].mxu0
    %v772 = vadd.f32 %v689, %v771
    %v773 = vpop.f32.mrb[0].mxu0
    %774 = vmatprep.mubr.bf16.mxu0 0
    %775 = vmatmul.mubr.bf16.gmra.mrb[0].mxu0 %v376
    %v776 = vpop.f32.mrb[0].mxu0
    %v777 = vadd.f32 %v690, %v776
    %v778 = vpop.f32.mrb[0].mxu0
    %v779 = vpop.f32.mrb[0].mxu0
    %v780 = vadd.f32 %v691, %v779
    %v781 = vpop.f32.mrb[0].mxu0
    %782 = vmatprep.mubr.bf16.mxu0 0
    %783 = vmatmul.mubr.bf16.gmra.mrb[0].mxu0 %v377
    %v784 = vpop.f32.mrb[0].mxu0
    %v785 = vadd.f32 %v692, %v784
    %v786 = vpop.f32.mrb[0].mxu0
    %v787 = vpop.f32.mrb[0].mxu0
    %v788 = vadd.f32 %v693, %v787
    %v789 = vpop.f32.mrb[0].mxu0
    %790 = vdwg.mxu0
    %v791 = vmax.f32 %v729, 0.0
    %v792 = vmax.f32 %v732, 0.0
    %v793 = vmax.f32 %v737, 0.0
    %v794 = vmax.f32 %v740, 0.0
    %v795 = vmax.f32 %v745, 0.0
    %v796 = vmax.f32 %v748, 0.0
    %v797 = vmax.f32 %v753, 0.0
    %v798 = vmax.f32 %v756, 0.0
    %v799 = vmax.f32 %v761, 0.0
    %v800 = vmax.f32 %v764, 0.0
    %v801 = vmax.f32 %v769, 0.0
    %v802 = vmax.f32 %v772, 0.0
    %v803 = vmax.f32 %v777, 0.0
    %v804 = vmax.f32 %v780, 0.0
    %v805 = vmax.f32 %v785, 0.0
    %v806 = vmax.f32 %v788, 0.0
    %v807 = vpack.c.bf16 %v792, %v791
    %v808 = vpack.c.bf16 %v794, %v793
    %v809 = vpack.c.bf16 %v796, %v795
    %v810 = vpack.c.bf16 %v798, %v797
    %v811 = vpack.c.bf16 %v800, %v799
    %v812 = vpack.c.bf16 %v802, %v801
    %v813 = vpack.c.bf16 %v804, %v803
    %v814 = vpack.c.bf16 %v806, %v805
    %s815 = scalar_lea.vmem [#allocation6], 128
    %v816 = vld [vmem:[%s815] sm:$0xf]
    %v817 = vld [vmem:[%s815 + $0x4] sm:$0xf]
    %v818 = vld [vmem:[%s815 + $0x8] sm:$0xf]
    %v819 = vld [vmem:[%s815 + $0xc] sm:$0xf]
    %v820 = vld [vmem:[%s815 + $0x10] sm:$0xf]
    %v821 = vld [vmem:[%s815 + $0x14] sm:$0xf]
    %v822 = vld [vmem:[%s815 + $0x18] sm:$0xf]
    %v823 = vld [vmem:[%s815 + $0x1c] sm:$0xf]
    %v824 = vld [vmem:[%s815 + $0x20] sm:$0xf]
    %v825 = vld [vmem:[%s815 + $0x24] sm:$0xf]
    %v826 = vld [vmem:[%s815 + $0x28] sm:$0xf]
    %v827 = vld [vmem:[%s815 + $0x2c] sm:$0xf]
    %v828 = vld [vmem:[%s815 + $0x30] sm:$0xf]
    %v829 = vld [vmem:[%s815 + $0x34] sm:$0xf]
    %v830 = vld [vmem:[%s815 + $0x38] sm:$0xf]
    %v831 = vld [vmem:[%s815 + $0x3c] sm:$0xf]
    %v848 = vunpack.c.l.b16 %v816
    %v849 = vunpack.c.l.b16 %v817
    %v850 = vunpack.c.l.b16 %v818
    %v851 = vunpack.c.l.b16 %v819
    %v852 = vunpack.c.l.b16 %v820
    %v853 = vunpack.c.l.b16 %v821
    %v854 = vunpack.c.l.b16 %v822
    %v855 = vunpack.c.l.b16 %v823
    %v856 = vunpack.c.l.b16 %v824
    %v857 = vunpack.c.l.b16 %v825
    %v858 = vunpack.c.l.b16 %v826
    %v859 = vunpack.c.l.b16 %v827
    %v860 = vunpack.c.l.b16 %v828
    %v861 = vunpack.c.l.b16 %v829
    %v862 = vunpack.c.l.b16 %v830
    %v863 = vunpack.c.l.b16 %v831
    %v864 = vpack.c.b16 %v849, %v848
    %v865 = vpack.c.b16 %v851, %v850
    %v866 = vpack.c.b16 %v853, %v852
    %v867 = vpack.c.b16 %v855, %v854
    %v868 = vpack.c.b16 %v857, %v856
    %v869 = vpack.c.b16 %v859, %v858
    %v870 = vpack.c.b16 %v861, %v860
    %v871 = vpack.c.b16 %v863, %v862
    %880 = vmatprep.subr.bf16.mxu0 0
    %881 = vmatpush1.bf16.msra.mxu0 %v864
    %882 = vmatprep.subr.bf16.mxu0 0
    %883 = vmatpush1.bf16.msra.mxu0 %v865
    %884 = vmatprep.subr.bf16.mxu0 0
    %885 = vmatpush1.bf16.msra.mxu0 %v866
    %886 = vmatprep.subr.bf16.mxu0 0
    %887 = vmatpush1.bf16.msra.mxu0 %v867
    %888 = vmatprep.subr.bf16.mxu0 0
    %889 = vmatpush1.bf16.msra.mxu0 %v868
    %890 = vmatprep.subr.bf16.mxu0 0
    %891 = vmatpush1.bf16.msra.mxu0 %v869
    %892 = vmatprep.subr.bf16.mxu0 0
    %893 = vmatpush1.bf16.msra.mxu0 %v870
    %894 = vmatprep.subr.bf16.mxu0 0
    %895 = vmatpush1.bf16.msra.mxu0 %v871
    %896 = vmatprep.subr.bf16.mxu0 0
    %897 = vmatpush1.bf16.msra.mxu0 0
    %898 = vmatprep.subr.bf16.mxu0 0
    %899 = vmatpush1.bf16.msra.mxu0 0
    %900 = vmatprep.subr.bf16.mxu0 0
    %901 = vmatpush1.bf16.msra.mxu0 0
    %902 = vmatprep.subr.bf16.mxu0 0
    %903 = vmatpush1.bf16.msra.mxu0 0
    %904 = vmatprep.subr.bf16.mxu0 0
    %905 = vmatpush1.bf16.msra.mxu0 0
    %906 = vmatprep.subr.bf16.mxu0 0
    %907 = vmatpush1.bf16.msra.mxu0 0
    %908 = vmatprep.subr.bf16.mxu0 0
    %909 = vmatpush1.bf16.msra.mxu0 0
    %910 = vmatprep.subr.bf16.mxu0 0
    %911 = vmatpush1.bf16.msra.mxu0 0
    %912 = vmatprep.mubr.bf16.mxu0 0
    %913 = vmatmul.mubr.bf16.gmra.mrb[0].mxu0 %v807
    %v914 = vpop.f32.mrb[0].mxu0
    %v915 = vadd.f32 0.0, %v914
    %v916 = vpop.f32.mrb[0].mxu0
    %v917 = vpop.f32.mrb[0].mxu0
    %v918 = vadd.f32 0.0, %v917
    %v919 = vpop.f32.mrb[0].mxu0
    %920 = vmatprep.mubr.bf16.mxu0 0
    %921 = vmatmul.mubr.bf16.gmra.mrb[0].mxu0 %v808
    %v922 = vpop.f32.mrb[0].mxu0
    %v923 = vadd.f32 0.0, %v922
    %v924 = vpop.f32.mrb[0].mxu0
    %v925 = vpop.f32.mrb[0].mxu0
    %v926 = vadd.f32 0.0, %v925
    %v927 = vpop.f32.mrb[0].mxu0
    %928 = vmatprep.mubr.bf16.mxu0 0
    %929 = vmatmul.mubr.bf16.gmra.mrb[0].mxu0 %v809
    %v930 = vpop.f32.mrb[0].mxu0
    %v931 = vadd.f32 0.0, %v930
    %v932 = vpop.f32.mrb[0].mxu0
    %v933 = vpop.f32.mrb[0].mxu0
    %v934 = vadd.f32 0.0, %v933
    %v935 = vpop.f32.mrb[0].mxu0
    %936 = vmatprep.mubr.bf16.mxu0 0
    %937 = vmatmul.mubr.bf16.gmra.mrb[0].mxu0 %v810
    %v938 = vpop.f32.mrb[0].mxu0
    %v939 = vadd.f32 0.0, %v938
    %v940 = vpop.f32.mrb[0].mxu0
    %v941 = vpop.f32.mrb[0].mxu0
    %v942 = vadd.f32 0.0, %v941
    %v943 = vpop.f32.mrb[0].mxu0
    %944 = vmatprep.mubr.bf16.mxu0 0
    %945 = vmatmul.mubr.bf16.gmra.mrb[0].mxu0 %v811
    %v946 = vpop.f32.mrb[0].mxu0
    %v947 = vadd.f32 0.0, %v946
    %v948 = vpop.f32.mrb[0].mxu0
    %v949 = vpop.f32.mrb[0].mxu0
    %v950 = vadd.f32 0.0, %v949
    %v951 = vpop.f32.mrb[0].mxu0
    %952 = vmatprep.mubr.bf16.mxu0 0
    %953 = vmatmul.mubr.bf16.gmra.mrb[0].mxu0 %v812
    %v954 = vpop.f32.mrb[0].mxu0
    %v955 = vadd.f32 0.0, %v954
    %v956 = vpop.f32.mrb[0].mxu0
    %v957 = vpop.f32.mrb[0].mxu0
    %v958 = vadd.f32 0.0, %v957
    %v959 = vpop.f32.mrb[0].mxu0
    %960 = vmatprep.mubr.bf16.mxu0 0
    %961 = vmatmul.mubr.bf16.gmra.mrb[0].mxu0 %v813
    %v962 = vpop.f32.mrb[0].mxu0
    %v963 = vadd.f32 0.0, %v962
    %v964 = vpop.f32.mrb[0].mxu0
    %v965 = vpop.f32.mrb[0].mxu0
    %v966 = vadd.f32 0.0, %v965
    %v967 = vpop.f32.mrb[0].mxu0
    %968 = vmatprep.mubr.bf16.mxu0 0
    %969 = vmatmul.mubr.bf16.gmra.mrb[0].mxu0 %v814
    %v970 = vpop.f32.mrb[0].mxu0
    %v971 = vadd.f32 0.0, %v970
    %v972 = vpop.f32.mrb[0].mxu0
    %v973 = vpop.f32.mrb[0].mxu0
    %v974 = vadd.f32 0.0, %v973
    %v975 = vpop.f32.mrb[0].mxu0
    %976 = vdwg.mxu0
    %v977 = vpack.c.bf16 %v918, %v915
    %v978 = vpack.c.bf16 %v926, %v923
    %v979 = vpack.c.bf16 %v934, %v931
    %v980 = vpack.c.bf16 %v942, %v939
    %v981 = vpack.c.bf16 %v950, %v947
    %v982 = vpack.c.bf16 %v958, %v955
    %v983 = vpack.c.bf16 %v966, %v963
    %v984 = vpack.c.bf16 %v974, %v971
    %s985 = scalar_lea.vmem [#allocation7], 256
    %v986 = vld [vmem:[%s985] sm:$0xff]
    %v987 = vld [vmem:[%s985 + $0x8] sm:$0xff]
    %v988 = vld [vmem:[%s985 + $0x10] sm:$0xff]
    %v989 = vld [vmem:[%s985 + $0x18] sm:$0xff]
    %v990 = vld [vmem:[%s985 + $0x20] sm:$0xff]
    %v991 = vld [vmem:[%s985 + $0x28] sm:$0xff]
    %v992 = vld [vmem:[%s985 + $0x30] sm:$0xff]
    %v993 = vld [vmem:[%s985 + $0x38] sm:$0xff]
    %v994 = vld [vmem:[%s985 + $0x40] sm:$0xff]
    %v995 = vld [vmem:[%s985 + $0x48] sm:$0xff]
    %v996 = vld [vmem:[%s985 + $0x50] sm:$0xff]
    %v997 = vld [vmem:[%s985 + $0x58] sm:$0xff]
    %v998 = vld [vmem:[%s985 + $0x60] sm:$0xff]
    %v999 = vld [vmem:[%s985 + $0x68] sm:$0xff]
    %v1000 = vld [vmem:[%s985 + $0x70] sm:$0xff]
    %v1001 = vld [vmem:[%s985 + $0x78] sm:$0xff]
    %1002 = vmatprep.subr.bf16.mxu0 0
    %1003 = vmatpush1.bf16.msra.mxu0 %v977
    %1004 = vmatprep.subr.bf16.mxu0 0
    %1005 = vmatpush1.bf16.msra.mxu0 %v978
    %1006 = vmatprep.subr.bf16.mxu0 0
    %1007 = vmatpush1.bf16.msra.mxu0 %v979
    %1008 = vmatprep.subr.bf16.mxu0 0
    %1009 = vmatpush1.bf16.msra.mxu0 %v980
    %1010 = vmatprep.subr.bf16.mxu0 0
    %1011 = vmatpush1.bf16.msra.mxu0 %v981
    %1012 = vmatprep.subr.bf16.mxu0 0
    %1013 = vmatpush1.bf16.msra.mxu0 %v982
    %1014 = vmatprep.subr.bf16.mxu0 0
    %1015 = vmatpush1.bf16.msra.mxu0 %v983
    %1016 = vmatprep.subr.bf16.mxu0 0
    %1017 = vmatpush1.bf16.msra.mxu0 %v984
    %1018 = vmatprep.subr.bf16.mxu0 0
    %1019 = vmatpush1.bf16.msra.mxu0 0
    %1020 = vmatprep.subr.bf16.mxu0 0
    %1021 = vmatpush1.bf16.msra.mxu0 0
    %1022 = vmatprep.subr.bf16.mxu0 0
    %1023 = vmatpush1.bf16.msra.mxu0 0
    %1024 = vmatprep.subr.bf16.mxu0 0
    %1025 = vmatpush1.bf16.msra.mxu0 0
    %1026 = vmatprep.subr.bf16.mxu0 0
    %1027 = vmatpush1.bf16.msra.mxu0 0
    %1028 = vmatprep.subr.bf16.mxu0 0
    %1029 = vmatpush1.bf16.msra.mxu0 0
    %1030 = vmatprep.subr.bf16.mxu0 0
    %1031 = vmatpush1.bf16.msra.mxu0 0
    %1032 = vmatprep.subr.bf16.mxu0 0
    %1033 = vmatpush1.bf16.msra.mxu0 0
    %1034 = vmatprep.mubr.bf16.mxu0 0
    %1035 = vmatmul.mubr.bf16.gmra.mrb[0].mxu0 %v370
    %v1036 = vpop.f32.mrb[0].mxu0
    %v1037 = vadd.f32 %v986, %v1036
    %v1038 = vpop.f32.mrb[0].mxu0
    %v1039 = vpop.f32.mrb[0].mxu0
    %v1040 = vadd.f32 %v987, %v1039
    %v1041 = vpop.f32.mrb[0].mxu0
    %1042 = vmatprep.mubr.bf16.mxu0 0
    %1043 = vmatmul.mubr.bf16.gmra.mrb[0].mxu0 %v371
    %v1044 = vpop.f32.mrb[0].mxu0
    %v1045 = vadd.f32 %v988, %v1044
    %v1046 = vpop.f32.mrb[0].mxu0
    %v1047 = vpop.f32.mrb[0].mxu0
    %v1048 = vadd.f32 %v989, %v1047
    %v1049 = vpop.f32.mrb[0].mxu0
    %1050 = vmatprep.mubr.bf16.mxu0 0
    %1051 = vmatmul.mubr.bf16.gmra.mrb[0].mxu0 %v372
    %v1052 = vpop.f32.mrb[0].mxu0
    %v1053 = vadd.f32 %v990, %v1052
    %v1054 = vpop.f32.mrb[0].mxu0
    %v1055 = vpop.f32.mrb[0].mxu0
    %v1056 = vadd.f32 %v991, %v1055
    %v1057 = vpop.f32.mrb[0].mxu0
    %1058 = vmatprep.mubr.bf16.mxu0 0
    %1059 = vmatmul.mubr.bf16.gmra.mrb[0].mxu0 %v373
    %v1060 = vpop.f32.mrb[0].mxu0
    %v1061 = vadd.f32 %v992, %v1060
    %v1062 = vpop.f32.mrb[0].mxu0
    %v1063 = vpop.f32.mrb[0].mxu0
    %v1064 = vadd.f32 %v993, %v1063
    %v1065 = vpop.f32.mrb[0].mxu0
    %1066 = vmatprep.mubr.bf16.mxu0 0
    %1067 = vmatmul.mubr.bf16.gmra.mrb[0].mxu0 %v374
    %v1068 = vpop.f32.mrb[0].mxu0
    %v1069 = vadd.f32 %v994, %v1068
    %v1070 = vpop.f32.mrb[0].mxu0
    %v1071 = vpop.f32.mrb[0].mxu0
    %v1072 = vadd.f32 %v995, %v1071
    %v1073 = vpop.f32.mrb[0].mxu0
    %1074 = vmatprep.mubr.bf16.mxu0 0
    %1075 = vmatmul.mubr.bf16.gmra.mrb[0].mxu0 %v375
    %v1076 = vpop.f32.mrb[0].mxu0
    %v1077 = vadd.f32 %v996, %v1076
    %v1078 = vpop.f32.mrb[0].mxu0
    %v1079 = vpop.f32.mrb[0].mxu0
    %v1080 = vadd.f32 %v997, %v1079
    %v1081 = vpop.f32.mrb[0].mxu0
    %1082 = vmatprep.mubr.bf16.mxu0 0
    %1083 = vmatmul.mubr.bf16.gmra.mrb[0].mxu0 %v376
    %v1084 = vpop.f32.mrb[0].mxu0
    %v1085 = vadd.f32 %v998, %v1084
    %v1086 = vpop.f32.mrb[0].mxu0
    %v1087 = vpop.f32.mrb[0].mxu0
    %v1088 = vadd.f32 %v999, %v1087
    %v1089 = vpop.f32.mrb[0].mxu0
    %1090 = vmatprep.mubr.bf16.mxu0 0
    %1091 = vmatmul.mubr.bf16.gmra.mrb[0].mxu0 %v377
    %v1092 = vpop.f32.mrb[0].mxu0
    %v1093 = vadd.f32 %v1000, %v1092
    %v1094 = vpop.f32.mrb[0].mxu0
    %v1095 = vpop.f32.mrb[0].mxu0
    %v1096 = vadd.f32 %v1001, %v1095
    %v1097 = vpop.f32.mrb[0].mxu0
    %1098 = vdwg.mxu0
    %1099 = vmax.xlane.f32.xlu0 %v1037
    %v1100 = vpop.xlane.xlu0 %1099
    %1101 = vmax.xlane.f32.xlu0 %v1040
    %v1102 = vpop.xlane.xlu0 %1101
    %1103 = vmax.xlane.f32.xlu0 %v1045
    %v1104 = vpop.xlane.xlu0 %1103
    %1105 = vmax.xlane.f32.xlu0 %v1048
    %v1106 = vpop.xlane.xlu0 %1105
    %1107 = vmax.xlane.f32.xlu0 %v1053
    %v1108 = vpop.xlane.xlu0 %1107
    %1109 = vmax.xlane.f32.xlu0 %v1056
    %v1110 = vpop.xlane.xlu0 %1109
    %1111 = vmax.xlane.f32.xlu0 %v1061
    %v1112 = vpop.xlane.xlu0 %1111
    %1113 = vmax.xlane.f32.xlu0 %v1064
    %v1114 = vpop.xlane.xlu0 %1113
    %1115 = vmax.xlane.f32.xlu0 %v1069
    %v1116 = vpop.xlane.xlu0 %1115
    %1117 = vmax.xlane.f32.xlu0 %v1072
    %v1118 = vpop.xlane.xlu0 %1117
    %1119 = vmax.xlane.f32.xlu0 %v1077
    %v1120 = vpop.xlane.xlu0 %1119
    %1121 = vmax.xlane.f32.xlu0 %v1080
    %v1122 = vpop.xlane.xlu0 %1121
    %1123 = vmax.xlane.f32.xlu0 %v1085
    %v1124 = vpop.xlane.xlu0 %1123
    %1125 = vmax.xlane.f32.xlu0 %v1088
    %v1126 = vpop.xlane.xlu0 %1125
    %1127 = vmax.xlane.f32.xlu0 %v1093
    %v1128 = vpop.xlane.xlu0 %1127
    %1129 = vmax.xlane.f32.xlu0 %v1096
    %v1130 = vpop.xlane.xlu0 %1129
    %v1131 = vsub.f32 %v1037, %v1100
    %v1132 = vsub.f32 %v1040, %v1102
    %v1133 = vsub.f32 %v1045, %v1104
    %v1134 = vsub.f32 %v1048, %v1106
    %v1135 = vsub.f32 %v1053, %v1108
    %v1136 = vsub.f32 %v1056, %v1110
    %v1137 = vsub.f32 %v1061, %v1112
    %v1138 = vsub.f32 %v1064, %v1114
    %v1139 = vsub.f32 %v1069, %v1116
    %v1140 = vsub.f32 %v1072, %v1118
    %v1141 = vsub.f32 %v1077, %v1120
    %v1142 = vsub.f32 %v1080, %v1122
    %v1143 = vsub.f32 %v1085, %v1124
    %v1144 = vsub.f32 %v1088, %v1126
    %v1145 = vsub.f32 %v1093, %v1128
    %v1146 = vsub.f32 %v1096, %v1130
    %v1147 = vmul.f32 %v1131, 1.442695
    %v1148 = vpow.pop %v1147
    %v1149 = vmul.f32 %v1132, 1.442695
    %v1150 = vpow.pop %v1149
    %v1151 = vmul.f32 %v1133, 1.442695
    %v1152 = vpow.pop %v1151
    %v1153 = vmul.f32 %v1134, 1.442695
    %v1154 = vpow.pop %v1153
    %v1155 = vmul.f32 %v1135, 1.442695
    %v1156 = vpow.pop %v1155
    %v1157 = vmul.f32 %v1136, 1.442695
    %v1158 = vpow.pop %v1157
    %v1159 = vmul.f32 %v1137, 1.442695
    %v1160 = vpow.pop %v1159
    %v1161 = vmul.f32 %v1138, 1.442695
    %v1162 = vpow.pop %v1161
    %v1163 = vmul.f32 %v1139, 1.442695
    %v1164 = vpow.pop %v1163
    %v1165 = vmul.f32 %v1140, 1.442695
    %v1166 = vpow.pop %v1165
    %v1167 = vmul.f32 %v1141, 1.442695
    %v1168 = vpow.pop %v1167
    %v1169 = vmul.f32 %v1142, 1.442695
    %v1170 = vpow.pop %v1169
    %v1171 = vmul.f32 %v1143, 1.442695
    %v1172 = vpow.pop %v1171
    %v1173 = vmul.f32 %v1144, 1.442695
    %v1174 = vpow.pop %v1173
    %v1175 = vmul.f32 %v1145, 1.442695
    %v1176 = vpow.pop %v1175
    %v1177 = vmul.f32 %v1146, 1.442695
    %v1178 = vpow.pop %v1177
    %1179 = vadd.xlane.f32.xlu0 %v1148
    %v1180 = vpop.xlane.xlu0 %1179
    %1181 = vadd.xlane.f32.xlu0 %v1150
    %v1182 = vpop.xlane.xlu0 %1181
    %1183 = vadd.xlane.f32.xlu0 %v1152
    %v1184 = vpop.xlane.xlu0 %1183
    %1185 = vadd.xlane.f32.xlu0 %v1154
    %v1186 = vpop.xlane.xlu0 %1185
    %1187 = vadd.xlane.f32.xlu0 %v1156
    %v1188 = vpop.xlane.xlu0 %1187
    %1189 = vadd.xlane.f32.xlu0 %v1158
    %v1190 = vpop.xlane.xlu0 %1189
    %1191 = vadd.xlane.f32.xlu0 %v1160
    %v1192 = vpop.xlane.xlu0 %1191
    %1193 = vadd.xlane.f32.xlu0 %v1162
    %v1194 = vpop.xlane.xlu0 %1193
    %1195 = vadd.xlane.f32.xlu0 %v1164
    %v1196 = vpop.xlane.xlu0 %1195
    %1197 = vadd.xlane.f32.xlu0 %v1166
    %v1198 = vpop.xlane.xlu0 %1197
    %1199 = vadd.xlane.f32.xlu0 %v1168
    %v1200 = vpop.xlane.xlu0 %1199
    %1201 = vadd.xlane.f32.xlu0 %v1170
    %v1202 = vpop.xlane.xlu0 %1201
    %1203 = vadd.xlane.f32.xlu0 %v1172
    %v1204 = vpop.xlane.xlu0 %1203
    %1205 = vadd.xlane.f32.xlu0 %v1174
    %v1206 = vpop.xlane.xlu0 %1205
    %1207 = vadd.xlane.f32.xlu0 %v1176
    %v1208 = vpop.xlane.xlu0 %1207
    %1209 = vadd.xlane.f32.xlu0 %v1178
    %v1210 = vpop.xlane.xlu0 %1209
    %v1211 = vlog2.pop %v1180
    %v1212 = vmul.f32 %v1211, 0.6931472
    %v1213 = vlog2.pop %v1182
    %v1214 = vmul.f32 %v1213, 0.6931472
    %v1215 = vlog2.pop %v1184
    %v1216 = vmul.f32 %v1215, 0.6931472
    %v1217 = vlog2.pop %v1186
    %v1218 = vmul.f32 %v1217, 0.6931472
    %v1219 = vlog2.pop %v1188
    %v1220 = vmul.f32 %v1219, 0.6931472
    %v1221 = vlog2.pop %v1190
    %v1222 = vmul.f32 %v1221, 0.6931472
    %v1223 = vlog2.pop %v1192
    %v1224 = vmul.f32 %v1223, 0.6931472
    %v1225 = vlog2.pop %v1194
    %v1226 = vmul.f32 %v1225, 0.6931472
    %v1227 = vlog2.pop %v1196
    %v1228 = vmul.f32 %v1227, 0.6931472
    %v1229 = vlog2.pop %v1198
    %v1230 = vmul.f32 %v1229, 0.6931472
    %v1231 = vlog2.pop %v1200
    %v1232 = vmul.f32 %v1231, 0.6931472
    %v1233 = vlog2.pop %v1202
    %v1234 = vmul.f32 %v1233, 0.6931472
    %v1235 = vlog2.pop %v1204
    %v1236 = vmul.f32 %v1235, 0.6931472
    %v1237 = vlog2.pop %v1206
    %v1238 = vmul.f32 %v1237, 0.6931472
    %v1239 = vlog2.pop %v1208
    %v1240 = vmul.f32 %v1239, 0.6931472
    %v1241 = vlog2.pop %v1210
    %v1242 = vmul.f32 %v1241, 0.6931472
    %v1243 = vsub.f32 %v1131, %v1212
    %v1244 = vsub.f32 %v1132, %v1214
    %v1245 = vsub.f32 %v1133, %v1216
    %v1246 = vsub.f32 %v1134, %v1218
    %v1247 = vsub.f32 %v1135, %v1220
    %v1248 = vsub.f32 %v1136, %v1222
    %v1249 = vsub.f32 %v1137, %v1224
    %v1250 = vsub.f32 %v1138, %v1226
    %v1251 = vsub.f32 %v1139, %v1228
    %v1252 = vsub.f32 %v1140, %v1230
    %v1253 = vsub.f32 %v1141, %v1232
    %v1254 = vsub.f32 %v1142, %v1234
    %v1255 = vsub.f32 %v1143, %v1236
    %v1256 = vsub.f32 %v1144, %v1238
    %v1257 = vsub.f32 %v1145, %v1240
    %v1258 = vsub.f32 %v1146, %v1242
    %1259 = vst [vmem:[%s4] sm:$0xff] %v1243
    %1260 = vst [vmem:[%s4 + $0x8] sm:$0xff] %v1244
    %1261 = vst [vmem:[%s4 + $0x10] sm:$0xff] %v1245
    %1262 = vst [vmem:[%s4 + $0x18] sm:$0xff] %v1246
    %1263 = vst [vmem:[%s4 + $0x20] sm:$0xff] %v1247
    %1264 = vst [vmem:[%s4 + $0x28] sm:$0xff] %v1248
    %1265 = vst [vmem:[%s4 + $0x30] sm:$0xff] %v1249
    %1266 = vst [vmem:[%s4 + $0x38] sm:$0xff] %v1250
    %1267 = vst [vmem:[%s4 + $0x40] sm:$0xff] %v1251
    %1268 = vst [vmem:[%s4 + $0x48] sm:$0xff] %v1252
    %1269 = vst [vmem:[%s4 + $0x50] sm:$0xff] %v1253
    %1270 = vst [vmem:[%s4 + $0x58] sm:$0xff] %v1254
    %1271 = vst [vmem:[%s4 + $0x60] sm:$0xff] %v1255
    %1272 = vst [vmem:[%s4 + $0x68] sm:$0xff] %v1256
    %1273 = vst [vmem:[%s4 + $0x70] sm:$0xff] %v1257
    %1274 = vst [vmem:[%s4 + $0x78] sm:$0xff] %v1258
    // Predicated region
    $region34: #{fused_forward.1} parent=1 // pred_check
      _
    $region35: #{fused_forward.1} parent=1 // pred_check_branch
      %1276 = sbr.rel (0) target = $region37
    $region36: #{fused_forward.1} parent=1 // pred_region
      _
    $region37: #{fused_forward.1} parent=1 // pred_fallthru
      _
    // Predicated region
    $region38: #{fused_forward.1} parent=1 // pred_check
      _
    $region39: #{fused_forward.1} parent=1 // pred_check_branch
      %1278 = sbr.rel (0) target = $region41
    $region40: #{fused_forward.1} parent=1 // pred_region
      _
    $region41: #{fused_forward.1} parent=1 // pred_fallthru
      _
    %1279 = vsyncpa [#allocation3], 1
    %1280 = vsyncpa [#allocation5], 1
    %1281 = vsyncpa [#allocation8], 1

</llo_original>
